<compile_context>
chip_gen: v7x
topology: tpu7x:2x2x1
jax: 0.10.0
libtpu: 0.0.40
codegen_flags: <defaults>
</compile_context>

<pallas_src>
import functools

import jax
import jax.numpy as jnp
from jax.experimental import pallas as pl
from jax.experimental.pallas import tpu as pltpu

_LANE = 128
_SUB = 8


def _tile_row_losses(z, tgt, pid, *, batch, tile_b):
    """Per-row -log p_joint[target] for one (TB, C) tile of fused joint logits."""
    tb, c = z.shape

    # Single numerically-stable logsumexp over the fused joint logits.
    m = jnp.max(z, axis=-1, keepdims=True)
    lse = m + jnp.log(jnp.sum(jnp.exp(z - m), axis=-1, keepdims=True))  # (TB, 1)

    # Lane iota (1, C) broadcast against (TB, 1) targets -> one-hot gather of
    # the raw joint logit on the VPU (no (TB, C) int32 temporary).
    cls_ids = jax.lax.broadcasted_iota(jnp.int32, (1, c), 1)
    picked = jnp.sum(jnp.where(cls_ids == tgt, z, 0.0), axis=-1, keepdims=True)
    row_loss = lse - picked  # = -(z[t] - lse(z)) = -log joint_p[t]

    # Mask rows of the last partial batch tile.  Their VMEM contents are
    # undefined, but the select drops any NaN/Inf they may have produced
    # (where does not propagate values from the unselected branch).
    row_ids = pid * tile_b + jax.lax.broadcasted_iota(jnp.int32, (tb, 1), 0)
    return jnp.where(row_ids < batch, row_loss, 0.0)


def _poe_kernel(x_ref, xa_ref, tgt_ref, out_ref, *, poe_alpha, batch, tile_b):
    pid = pl.program_id(0)
    # Fused joint logits: log_softmax(log_softmax(x)+a*log_softmax(xa))
    #                  == log_softmax(x + a*xa)
    z = x_ref[...].astype(jnp.float32) + poe_alpha * xa_ref[...].astype(jnp.float32)
    losses = _tile_row_losses(z, tgt_ref[...], pid, batch=batch, tile_b=tile_b)
    out_ref[0, 0] = jnp.sum(losses)  # per-tile partial sum


def _poe_kernel_ensemble(x_ref, xa_ref, xa2_ref, tgt_ref, out_ref, *,
                         batch, tile_b):
    pid = pl.program_id(0)
    z = (x_ref[...].astype(jnp.float32)
         + xa_ref[...].astype(jnp.float32)
         + xa2_ref[...].astype(jnp.float32))
    losses = _tile_row_losses(z, tgt_ref[...], pid, batch=batch, tile_b=tile_b)
    out_ref[0, 0] = jnp.sum(losses)


def poe_loss(inputs, targets, inputs_adv, second_inputs_adv=None, *,
             size_average=True, ensemble_training=False, poe_alpha=1.0,
             block_b=None):
    """Pallas equivalent of POELoss.forward.

    `inputs` / `inputs_adv` / `second_inputs_adv` may be f32 or bf16 (bf16 is
    preferred for large problems: halves HBM traffic; math is done in f32).
    """
    B, C = inputs.shape
    n_inputs = 3 if ensemble_training else 2
    itemsize = jnp.dtype(inputs.dtype).itemsize
    c_lanes = pl.cdiv(C, _LANE) * _LANE  # vreg footprint of one class row

    # Batch tile: largest multiple of 8 such that (double-buffered input tiles
    # + ~4 f32 intermediate tiles) stays within ~24 MiB.
    if block_b is None:
        budget = 24 * 1024 * 1024
        per_row = n_inputs * 2 * C * itemsize + 4 * c_lanes * 4
        block_b = max(_SUB, min(1024, (budget // per_row) // _SUB * _SUB))
    block_b = max(_SUB, (block_b // _SUB) * _SUB)
    block_b = min(block_b, pl.cdiv(B, _SUB) * _SUB)
    G = pl.cdiv(B, block_b)

    # Explicit scoped-VMEM limit covering inputs (double-buffered) + f32
    # working set, with margin; capped below v7x's 64 MiB physical VMEM.
    est_vmem = (n_inputs * 2 * block_b * C * itemsize
                + 4 * block_b * c_lanes * 4
                + (1 << 20))
    vmem_limit = int(min(48 << 20, max(16 << 20, 2 * est_vmem)))

    tgt = targets.reshape(-1).astype(jnp.int32).reshape(B, 1)

    logits_spec = pl.BlockSpec((block_b, C), lambda i: (i, 0))
    tgt_spec = pl.BlockSpec((block_b, 1), lambda i: (i, 0))
    out_spec = pl.BlockSpec((1, 1), lambda i: (i, 0),
                            memory_space=pltpu.MemorySpace.SMEM)

    if ensemble_training:
        assert second_inputs_adv is not None
        kernel = functools.partial(_poe_kernel_ensemble, batch=B, tile_b=block_b)
        args = (inputs, inputs_adv, second_inputs_adv, tgt)
    else:
        kernel = functools.partial(_poe_kernel, poe_alpha=float(poe_alpha),
                                   batch=B, tile_b=block_b)
        args = (inputs, inputs_adv, tgt)

    in_specs = [logits_spec] * (len(args) - 1) + [tgt_spec]

    partial_sums = pl.pallas_call(
        kernel,
        out_shape=jax.ShapeDtypeStruct((G, 1), jnp.float32),
        grid_spec=pltpu.PrefetchScalarGridSpec(
            num_scalar_prefetch=0,
            grid=(G,),
            in_specs=in_specs,
            out_specs=out_spec),
        compiler_params=pltpu.CompilerParams(
            # Each grid step writes its own partial-sum block -> independent,
            # so the batch axis can be sharded across v7x's two TensorCores.
            dimension_semantics=("parallel",),
            vmem_limit_bytes=vmem_limit),
    )(*args)

    total = jnp.sum(partial_sums)
    return total / B if size_average else total


def _poe_loss_ref(inputs, targets, inputs_adv, second_inputs_adv=None, *,
                  size_average=True, ensemble_training=False, poe_alpha=1.0):
    """Pure-JAX reference mirroring the PyTorch module."""
    lp = jax.nn.log_softmax(inputs.astype(jnp.float32), axis=1)
    lpa = jax.nn.log_softmax(inputs_adv.astype(jnp.float32), axis=1)
    if ensemble_training:
        lpa2 = jax.nn.log_softmax(second_inputs_adv.astype(jnp.float32), axis=1)
        joint_lp = jax.nn.log_softmax(lp + lpa + lpa2, axis=1)
    else:
        joint_lp = jax.nn.log_softmax(lp + poe_alpha * lpa, axis=1)
    picked = jnp.take_along_axis(
        joint_lp, targets.reshape(-1, 1).astype(jnp.int32), axis=1)[:, 0]
    batch_loss = -picked
    return jnp.mean(batch_loss) if size_average else jnp.sum(batch_loss)


if __name__ == "__main__":
    key = jax.random.PRNGKey(0)
    k1, k2, k3, k4 = jax.random.split(key, 4)

    # Case 1: non-ensemble, aligned shapes, mean reduction.
    B, C = 8, 32
    x = jax.random.normal(k1, (B, C), dtype=jnp.float32)
    xa = jax.random.normal(k2, (B, C), dtype=jnp.float32)
    t = jax.random.randint(k3, (B,), 0, C, dtype=jnp.int32)
    out1 = jax.block_until_ready(poe_loss(x, t, xa, size_average=True, poe_alpha=1.0))
    ref1 = _poe_loss_ref(x, t, xa, size_average=True, poe_alpha=1.0)
    assert jnp.allclose(out1, ref1, atol=1e-4, rtol=1e-4), (out1, ref1)

    # Case 2: ragged batch (multi-tile grid + partial last block, no HBM pad),
    # non-multiple-of-128 classes, sum reduction, alpha != 1.
    B2, C2 = 10, 48
    x2 = jax.random.normal(k1, (B2, C2), dtype=jnp.float32)
    xa2 = jax.random.normal(k2, (B2, C2), dtype=jnp.float32)
    t2 = jax.random.randint(k4, (B2,), 0, C2, dtype=jnp.int32)
    out2 = jax.block_until_ready(
        poe_loss(x2, t2, xa2, size_average=False, poe_alpha=2.0, block_b=8))
    ref2 = _poe_loss_ref(x2, t2, xa2, size_average=False, poe_alpha=2.0)
    assert jnp.allclose(out2, ref2, atol=1e-4, rtol=1e-4), (out2, ref2)

    # Case 3: ensemble path (3 experts).
    xb = jax.random.normal(k4, (B, C), dtype=jnp.float32)
    out3 = jax.block_until_ready(
        poe_loss(x, t, xa, xb, size_average=True, ensemble_training=True))
    ref3 = _poe_loss_ref(x, t, xa, xb, size_average=True, ensemble_training=True)
    assert jnp.allclose(out3, ref3, atol=1e-4, rtol=1e-4), (out3, ref3)

    # Case 4: bf16 logits stay bf16 in HBM, f32 math inside the kernel.
    xbf = x.astype(jnp.bfloat16)
    xabf = xa.astype(jnp.bfloat16)
    out4 = jax.block_until_ready(poe_loss(xbf, t, xabf, size_average=True))
    ref4 = _poe_loss_ref(xbf, t, xabf, size_average=True)
    assert jnp.allclose(out4, ref4, atol=5e-3, rtol=5e-3), (out4, ref4)

    print("KERNEL_OK")
</pallas_src>

<mosaic_0001>
module attributes {stable_mosaic.version = 11 : i64} {
  func.func @_poe_kernel(%arg0: i32, %arg1: memref<8x32xf32, #tpu.memory_space<vmem>>, %arg2: memref<8x32xf32, #tpu.memory_space<vmem>>, %arg3: memref<8x1xi32, #tpu.memory_space<vmem>>, %arg4: memref<1x1xf32, #tpu.memory_space<smem>>) attributes {dimension_semantics = [#tpu.dimension_semantics<parallel>], iteration_bounds = array<i64: 1>, scalar_prefetch = 0 : i64, scratch_operands = 0 : i64, tpu.core_type = #tpu.core_type<tc>, window_params = [{transform_indices = @transform_0, window_bounds = array<i64: 8, 32>}, {transform_indices = @transform_1, window_bounds = array<i64: 8, 32>}, {transform_indices = @transform_2, window_bounds = array<i64: 8, 1>}, {transform_indices = @transform_3, window_bounds = array<i64: 1, 1>}]} {
    %c0 = arith.constant 0 : index
    %c0_0 = arith.constant 0 : index
    %0 = vector.load %arg1[%c0, %c0_0] : memref<8x32xf32, #tpu.memory_space<vmem>>, vector<8x32xf32>
    %c0_1 = arith.constant 0 : index
    %c0_2 = arith.constant 0 : index
    %1 = vector.load %arg2[%c0_1, %c0_2] : memref<8x32xf32, #tpu.memory_space<vmem>>, vector<8x32xf32>
    %cst = arith.constant 1.000000e+00 : f32
    %2 = vector.broadcast %cst : f32 to vector<8x32xf32>
    %3 = arith.mulf %2, %1 : vector<8x32xf32>
    %4 = arith.addf %0, %3 : vector<8x32xf32>
    %c0_3 = arith.constant 0 : index
    %c0_4 = arith.constant 0 : index
    %5 = vector.load %arg3[%c0_3, %c0_4] : memref<8x1xi32, #tpu.memory_space<vmem>>, vector<8x1xi32>
    %cst_5 = arith.constant dense<0xFF800000> : vector<8xf32>
    %6 = vector.multi_reduction <maximumf>, %4, %cst_5 [1] : vector<8x32xf32> to vector<8xf32>
    %7 = vector.shape_cast %6 : vector<8xf32> to vector<8x1xf32>
    %8 = vector.broadcast %7 : vector<8x1xf32> to vector<8x32xf32>
    %9 = arith.subf %4, %8 : vector<8x32xf32>
    %10 = math.exp %9 : vector<8x32xf32>
    %cst_6 = arith.constant dense<0.000000e+00> : vector<8xf32>
    %11 = vector.multi_reduction <add>, %10, %cst_6 [1] : vector<8x32xf32> to vector<8xf32>
    %12 = vector.shape_cast %11 : vector<8xf32> to vector<8x1xf32>
    %13 = math.log %12 : vector<8x1xf32>
    %14 = arith.addf %7, %13 : vector<8x1xf32>
    %15 = tpu.iota {dimensions = array<i32: 1>} : vector<1x32xi32>
    %16 = vector.broadcast %15 : vector<1x32xi32> to vector<8x32xi32>
    %17 = vector.broadcast %5 : vector<8x1xi32> to vector<8x32xi32>
    %18 = arith.cmpi eq, %16, %17 : vector<8x32xi32>
    %cst_7 = arith.constant 0.000000e+00 : f32
    %19 = vector.broadcast %cst_7 : f32 to vector<8x32xf32>
    %20 = arith.select %18, %4, %19 : vector<8x32xi1>, vector<8x32xf32>
    %cst_8 = arith.constant dense<0.000000e+00> : vector<8xf32>
    %21 = vector.multi_reduction <add>, %20, %cst_8 [1] : vector<8x32xf32> to vector<8xf32>
    %22 = vector.shape_cast %21 : vector<8xf32> to vector<8x1xf32>
    %23 = arith.subf %14, %22 : vector<8x1xf32>
    %c8_i32 = arith.constant 8 : i32
    %24 = arith.muli %arg0, %c8_i32 : i32
    %25 = tpu.iota {dimensions = array<i32: 0>} : vector<8x1xi32>
    %26 = vector.broadcast %24 : i32 to vector<8x1xi32>
    %27 = arith.addi %26, %25 : vector<8x1xi32>
    %c8_i32_9 = arith.constant 8 : i32
    %28 = vector.broadcast %c8_i32_9 : i32 to vector<8x1xi32>
    %29 = arith.cmpi slt, %27, %28 : vector<8x1xi32>
    %cst_10 = arith.constant 0.000000e+00 : f32
    %30 = vector.broadcast %cst_10 : f32 to vector<8x1xf32>
    %31 = arith.select %29, %23, %30 : vector<8x1xi1>, vector<8x1xf32>
    %32 = vector.shape_cast %31 : vector<8x1xf32> to vector<1x8x1xf32>
    %cst_11 = arith.constant dense<0.000000e+00> : vector<1xf32>
    %33 = vector.multi_reduction <add>, %32, %cst_11 [1, 2] : vector<1x8x1xf32> to vector<1xf32>
    %34 = vector.shape_cast %33 : vector<1xf32> to vector<1x1x1xf32>
    %35 = vector.extract %34[0, 0, 0] : f32 from vector<1x1x1xf32>
    %c0_12 = arith.constant 0 : index
    %c0_13 = arith.constant 0 : index
    %36 = memref.load %arg4[%c0_12, %c0_13] : memref<1x1xf32, #tpu.memory_space<smem>>
    memref.store %35, %arg4[%c0_12, %c0_13] : memref<1x1xf32, #tpu.memory_space<smem>>
    return
  }
  func.func @transform_0(%arg0: i32) -> (i32, i32) {
    %c0_i32 = arith.constant 0 : i32
    %c0_i32_0 = arith.constant 0 : i32
    return %arg0, %c0_i32 : i32, i32
  }
  func.func @transform_1(%arg0: i32) -> (i32, i32) {
    %c0_i32 = arith.constant 0 : i32
    %c0_i32_0 = arith.constant 0 : i32
    return %arg0, %c0_i32 : i32, i32
  }
  func.func @transform_2(%arg0: i32) -> (i32, i32) {
    %c0_i32 = arith.constant 0 : i32
    %c0_i32_0 = arith.constant 0 : i32
    return %arg0, %c0_i32 : i32, i32
  }
  func.func @transform_3(%arg0: i32) -> (i32, i32) {
    %c0_i32 = arith.constant 0 : i32
    %c0_i32_0 = arith.constant 0 : i32
    return %arg0, %c0_i32 : i32, i32
  }
}

</mosaic_0001>

<llo_original>
// kernel: tpu_custom_call.1
$region0: #{tpu_custom_call.1}
  #allocation0 [shape = 'u32[]', space=smem, size = 0x4, offset = 0x4, fixed_abs, tag = 'smem constant byte address 0x4 - core index']
  #allocation1 [shape = 'u32[144,128]{1,0:T(1,128)}', space=vmem, size = 0x12000, scoped, tag = 'internal scratch']
  %s0 = inlined_call_operand.vmem [shape: f32[8,32], index: 0, kind: input, shape index: {}]
  %s1 = inlined_call_operand.hbm [shape: f32[8,32], index: 1, kind: input, shape index: {}]
  %s2 = inlined_call_operand.vmem [shape: s32[8,1], index: 2, kind: input, shape index: {}]
  %s3 = inlined_call_operand.hbm [shape: f32[1,1], index: 3, kind: output, shape index: {}]
  %s4 = sld [smem:[#allocation0]]
  $region26: #{tpu_custom_call.1} parent=0
    _
  %s6 = ssub.s32 1, %s4
  %s7 = scalar_select 0, %s6, %s4
  $region1: #{tpu_custom_call.1} parent=0
    #allocation2 [shape = 'u8[4096]{0}', space=vmem, size = 0x1000, scoped, tag = 'input window, operand 1, single buffered']
    #allocation3 [shape = 's32[1]{0}', space=sflag, size = 0x4, scoped, tag = 'scoped memory for tpu_custom_call.1']
    #allocation4 [shape = 's32[1]{0}', space=sflag, size = 0x4, scoped, tag = 'scoped memory for tpu_custom_call.1']
    #allocation5 [shape = 'u8[512]{0}', space=smem, size = 0x200, scoped, tag = 'output window, operand 0, single buffered']
    %8 = vsyncpa [#allocation3], 0
    %9 = vsyncpa [#allocation4], 0
    // Predicated region
    $region2: #{tpu_custom_call.1} parent=1 // pred_check
      _
    $region3: #{tpu_custom_call.1} parent=1 // pred_check_branch
      %11 = sbr.rel (0) target = $region5
    $region4: #{tpu_custom_call.1} parent=1 // pred_region
      _
    $region5: #{tpu_custom_call.1} parent=1 // pred_fallthru
      _
    // Predicated region
    $region6: #{tpu_custom_call.1} parent=1 // pred_check
      _
    $region7: #{tpu_custom_call.1} parent=1 // pred_check_branch
      %13 = sbr.rel (0) target = $region9
    $region8: #{tpu_custom_call.1} parent=1 // pred_region
      %s15 = ssub.s32 128, 128
      %16 = vsyncadd [#allocation3], %s15
      %s18 = sshll.u32 [#allocation2], 4
      %s19 = int_to_ptr.vmem [resolvable:$true] %s18
      %21 = dma.hbm_to_vmem [thread:$0]  %s1, 128, %s19, [#allocation3]
    $region9: #{tpu_custom_call.1} parent=1 // pred_fallthru
      _
    // Predicated region
    $region10: #{tpu_custom_call.1} parent=1 // pred_check
      _
    $region11: #{tpu_custom_call.1} parent=1 // pred_check_branch
      %23 = sbr.rel (0) target = $region13
    $region12: #{tpu_custom_call.1} parent=1 // pred_region
      _
    $region13: #{tpu_custom_call.1} parent=1 // pred_fallthru
      _
    // Predicated region
    $region14: #{tpu_custom_call.1} parent=1 // pred_check
      _
    $region15: #{tpu_custom_call.1} parent=1 // pred_check_branch
      %25 = sbr.rel (0) target = $region17
    $region16: #{tpu_custom_call.1} parent=1 // pred_region
      %26 = dma.done [#allocation3], 128
    $region17: #{tpu_custom_call.1} parent=1 // pred_fallthru
      _
    %v27 = vld [vmem:[%s0] sm:$0xff]
    %v28 = vld [vmem:[#allocation2] sm:$0xff]
    %v29 = vadd.f32 %v27, %v28
    %v30 = vld [vmem:[%s2] sm:$0xff]
    %vm31 = vcmask 261120
    %v32 = vsel %vm31, %v29, -inf
    %33 = vmax.xlane.f32.xlu0 %v32
    %v34 = vpop.xlane.xlu0 %33
    %v35 = vsub.f32 %v29, %v34
    %v36 = vmul.f32 %v35, 1.442695
    %v37 = vpow.pop %v36
    %v38 = vsel %vm31, %v37, 0.0
    %39 = vadd.xlane.f32.xlu0 %v38
    %v40 = vpop.xlane.xlu0 %39
    %v41 = vlog2.pop %v40
    %v42 = vmul.f32 %v41, 0.6931472
    %v43 = vadd.f32 %v34, %v42
    %v44 = vlaneseq
    %v45 = vand.u32 %v44, 127
    %46 = vset.pattern.permute.xlu0 0
    %47 = vperm.xlu0 %46, %v30
    %v48 = vpop.permute.xlu0 %47
    %vm49 = vcmp.eq.s32.totalorder %v45, %v48
    %v50 = vsel %vm49, %v29, 0.0
    %v51 = vsel %vm31, %v50, 0.0
    %52 = vadd.xlane.f32.xlu0 %v51
    %v53 = vpop.xlane.xlu0 %52
    %v54 = vsub.f32 %v43, %v53
    %s55 = smul.u32 0, 8
    %v56 = vlaneseq
    %v57 = vshrl.u32 %v56, 7
    %v58 = vstv %s55
    %v59 = vadd.s32 %v58, %v57
    %vm60 = vcmp.lt.s32.totalorder %v59, 8
    %v61 = vsel %vm60, %v54, 0.0
    %vm62 = vcmask 7168
    %v63 = vsel %vm62, %v61, 0.0
    %64 = vadd.xlane.f32.xlu0 %v63
    %v65 = vpop.xlane.xlu0 %64
    %v66 = vrot.slane %v65, 4
    %v67 = vadd.f32 %v65, %v66
    %v68 = vrot.slane %v67, 2
    %v69 = vadd.f32 %v67, %v68
    %v70 = vrot.slane %v69, 1
    %v71 = vadd.f32 %v69, %v70
    %s72 = vtos %v71
    %s73 = scalar_lea.smem [#allocation5], 0
    %74 = sst [smem:[%s73]] %s72
    // Predicated region
    $region18: #{tpu_custom_call.1} parent=1 // pred_check
      _
    $region19: #{tpu_custom_call.1} parent=1 // pred_check_branch
      %76 = sbr.rel (0) target = $region21
    $region20: #{tpu_custom_call.1} parent=1 // pred_region
      %s78 = ssub.s32 16, 16
      %79 = vsyncadd [#allocation4], %s78
      %82 = dma.smem_to_hbm [#allocation5], 16, %s3, [#allocation4]
    $region21: #{tpu_custom_call.1} parent=1 // pred_fallthru
      _
    // Predicated region
    $region22: #{tpu_custom_call.1} parent=1 // pred_check
      _
    $region23: #{tpu_custom_call.1} parent=1 // pred_check_branch
      %84 = sbr.rel (0) target = $region25
    $region24: #{tpu_custom_call.1} parent=1 // pred_region
      %85 = dma.done [#allocation4], 16
    $region25: #{tpu_custom_call.1} parent=1 // pred_fallthru
      _
    %86 = sfence
    %87 = vsyncpa [#allocation3], 1
    %88 = vsyncpa [#allocation4], 1

</llo_original>
